<compile_context>
chip_gen: v7x
topology: tpu7x:2x2x1
jax: 0.10.0
libtpu: 0.0.40
codegen_flags: <defaults>
</compile_context>

<pallas_src>
import math

import jax
import jax.numpy as jnp
import numpy as np
from jax import lax
from jax.experimental import pallas as pl
from jax.experimental.pallas import tpu as pltpu

GROUP_PAD = 32                       # each FixedEmbedding table padded to 32 rows
N_GROUPS = 4                         # [month, weekday, day, hour]
TABLE_ROWS = N_GROUPS * GROUP_PAD    # 128 -> exactly one lane-aligned one-hot block
GROUP_SIZES = (13, 7, 32, 24)        # valid index count per group (freq='h')


def _fixed_embedding_table(c_in, d_model):
    """Exact replica of FixedEmbedding's fixed sin/cos nn.Embedding weight."""
    position = np.arange(c_in, dtype=np.float32)[:, None]
    div_term = np.exp(
        np.arange(0, d_model, 2, dtype=np.float32) * -(math.log(10000.0) / d_model)
    )
    w = np.zeros((c_in, d_model), dtype=np.float32)
    w[:, 0::2] = np.sin(position * div_term)
    w[:, 1::2] = np.cos(position * div_term)
    return w


def _round_up(a, b):
    return ((a + b - 1) // b) * b


def _pick_tile(n_rows, tile_rows):
    """Adaptive row tile: big tiles for roofline, no over-padding for tiny inputs,
    and an even grid (when grid > 1) so v7x's two TensorCores both get work."""
    n8 = _round_up(max(n_rows, 8), 8)
    t = min(_round_up(tile_rows, 8), n8)
    g = pl.cdiv(n8, t)
    if g > 1 and g % 2 == 1:
        g += 1
        t = _round_up(pl.cdiv(n8, g), 8)
    return t


def _embed_kernel(x3c_ref, mark_ref, wt_ref, wc_ref, out_ref):
    # x3c_ref : (TILE, 3C)   compute_dtype  rows = [x[t-1] | x[t] | x[t+1]] (circular shift in wrapper)
    # mark_ref: (TILE, 4)    int32          group offsets (0/32/64/96) pre-added + clamped in wrapper
    # wt_ref  : (128, D)     compute_dtype  4 stacked FixedEmbedding tables (lane-aligned K=128)
    # wc_ref  : (3C, D)      compute_dtype  conv taps k=-1,0,+1
    # out_ref : (TILE, D)    out_dtype
    rows = x3c_ref.shape[0]
    x3c = x3c_ref[...]
    m = mark_ref[...]

    # Single iota + OR of 4 compares. The 4 groups live in disjoint 32-row bands, so each
    # one-hot row has exactly 4 ones -> onehot @ tables == sum of the 4 embedding lookups.
    lane = lax.broadcasted_iota(jnp.int32, (rows, TABLE_ROWS), 1)
    onehot = (
        (lane == m[:, 0:1]) | (lane == m[:, 1:2]) | (lane == m[:, 2:3]) | (lane == m[:, 3:4])
    ).astype(wt_ref.dtype)

    # Two MXU dots into one f32 accumulator (no lane-misaligned concat / no (TILE,140) relayout):
    #   temporal(FixedEmbedding sum) = onehot @ tables   (aligned K=128)
    #   conv(TokenEmbedding)         = x3c    @ taps     (small K=3C)
    acc = jnp.dot(onehot, wt_ref[...], preferred_element_type=jnp.float32)
    acc = acc + jnp.dot(x3c, wc_ref[...], preferred_element_type=jnp.float32)
    out_ref[...] = acc.astype(out_ref.dtype)
    # dropout(p=0.1) is identity in eval mode.
    # TODO(synk): training-mode dropout (stateful PRNG mask) not implemented.


def data_embedding_wo_pos(x, x_mark, conv_w, tables, *, tile_rows=2048,
                          compute_dtype=jnp.float32, out_dtype=jnp.float32):
    """Eval-mode forward. compute_dtype/out_dtype=bf16 is the perf path; f32 for strict parity."""
    B, L, C = x.shape
    D = conv_w.shape[0]

    # --- circular Conv1d shift hoisted out of the kernel (correct across any row tiling) ---
    x3c = jnp.concatenate([jnp.roll(x, 1, axis=1), x, jnp.roll(x, -1, axis=1)], axis=-1)
    x3c = x3c.reshape(B * L, 3 * C).astype(compute_dtype)

    # --- clamp marks to each table's valid range and pre-add the 32-row group offsets ---
    # (torch nn.Embedding would raise on OOB indices; here we clamp -- intentional difference.)
    sizes = jnp.asarray(GROUP_SIZES, jnp.int32)
    offs = jnp.arange(N_GROUPS, dtype=jnp.int32) * GROUP_PAD
    marks = jnp.clip(x_mark.reshape(B * L, N_GROUPS).astype(jnp.int32), 0, sizes - 1) + offs

    # --- weights: stacked FixedEmbedding tables (128, D) and conv taps (3C, D), kept separate ---
    w_tables = jnp.concatenate(
        [jnp.pad(tables[name], ((0, GROUP_PAD - tables[name].shape[0]), (0, 0)))
         for name in ("month", "weekday", "day", "hour")],
        axis=0,
    ).astype(compute_dtype)                                            # (128, D)
    w_taps = jnp.concatenate(
        [conv_w[:, :, k].T for k in range(3)], axis=0                  # matches [x_prev|x|x_next]
    ).astype(compute_dtype)                                            # (3C, D)

    # --- flatten B*L into large row tiles; pad so the grid divides evenly ---
    n = B * L
    tile = _pick_tile(n, tile_rows)
    grid = pl.cdiv(n, tile)
    n_pad = grid * tile
    if n_pad != n:
        x3c = jnp.pad(x3c, ((0, n_pad - n), (0, 0)))
        marks = jnp.pad(marks, ((0, n_pad - n), (0, 0)))   # padded rows hit valid table row 0

    in_bytes = jnp.dtype(compute_dtype).itemsize
    out_bytes = jnp.dtype(out_dtype).itemsize
    cost = pl.CostEstimate(
        flops=2 * n_pad * (TABLE_ROWS + 3 * C) * D,
        transcendentals=0,
        bytes_accessed=(n_pad * 3 * C * in_bytes           # x3c
                        + n_pad * N_GROUPS * 4              # marks
                        + (TABLE_ROWS + 3 * C) * D * in_bytes  # weights
                        + n_pad * D * out_bytes),            # output
    )

    out = pl.pallas_call(
        _embed_kernel,
        out_shape=jax.ShapeDtypeStruct((n_pad, D), out_dtype),
        grid_spec=pltpu.PrefetchScalarGridSpec(
            num_scalar_prefetch=0,
            grid=(grid,),
            in_specs=[
                pl.BlockSpec((tile, 3 * C), lambda i: (i, 0)),
                pl.BlockSpec((tile, N_GROUPS), lambda i: (i, 0)),
                pl.BlockSpec((TABLE_ROWS, D), lambda i: (0, 0)),   # constant -> VMEM-resident
                pl.BlockSpec((3 * C, D), lambda i: (0, 0)),        # constant -> VMEM-resident
            ],
            out_specs=pl.BlockSpec((tile, D), lambda i: (i, 0)),
        ),
        compiler_params=pltpu.CompilerParams(
            dimension_semantics=("parallel",),   # row-tile axis shards across v7x's 2 TCs
        ),
        cost_estimate=cost,
    )(x3c, marks, w_tables, w_taps)
    return out[:n].reshape(B, L, D)


def _reference(x, x_mark, conv_w, tables):
    """Pure-JAX replica of the eval-mode forward (FixedEmbedding lookups + circular conv)."""
    x_prev = jnp.roll(x, 1, axis=1)
    x_next = jnp.roll(x, -1, axis=1)
    conv = x_prev @ conv_w[:, :, 0].T + x @ conv_w[:, :, 1].T + x_next @ conv_w[:, :, 2].T
    temporal = (
        tables["hour"][x_mark[..., 3]]
        + tables["day"][x_mark[..., 2]]
        + tables["weekday"][x_mark[..., 1]]
        + tables["month"][x_mark[..., 0]]
    )
    return conv + temporal


if __name__ == "__main__":
    B, L, C_in, D = 2, 8, 4, 128   # d_model=128 -> lane-dense output stores

    key = jax.random.PRNGKey(0)
    kx, kmark, kw = jax.random.split(key, 3)

    x = jax.random.normal(kx, (B, L, C_in), dtype=jnp.float32)
    # x_mark columns: [month (0..12), weekday (0..6), day (0..31), hour (0..23)]
    k0, k1, k2, k3 = jax.random.split(kmark, 4)
    x_mark = jnp.stack(
        [
            jax.random.randint(k0, (B, L), 0, 13),
            jax.random.randint(k1, (B, L), 0, 7),
            jax.random.randint(k2, (B, L), 0, 32),
            jax.random.randint(k3, (B, L), 0, 24),
        ],
        axis=-1,
    ).astype(jnp.int32)

    # TokenEmbedding Conv1d weight (D, C_in, 3), kaiming_normal_(fan_in, leaky_relu)-style init.
    fan_in = C_in * 3
    gain = math.sqrt(2.0 / (1.0 + 0.01 ** 2))
    std = gain / math.sqrt(fan_in)
    conv_w = std * jax.random.normal(kw, (D, C_in, 3), dtype=jnp.float32)

    # FixedEmbedding sin/cos tables (TemporalEmbedding, embed_type='fixed', freq='h').
    tables = {
        "month": jnp.asarray(_fixed_embedding_table(13, D)),
        "weekday": jnp.asarray(_fixed_embedding_table(7, D)),
        "day": jnp.asarray(_fixed_embedding_table(32, D)),
        "hour": jnp.asarray(_fixed_embedding_table(24, D)),
    }

    # f32 parity path (bf16 compute_dtype/out_dtype is the perf path; it would break the 1e-5 check).
    out = data_embedding_wo_pos(x, x_mark, conv_w, tables)
    out = jax.block_until_ready(out)

    ref = _reference(x, x_mark, conv_w, tables)
    np.testing.assert_allclose(np.asarray(out), np.asarray(ref), rtol=1e-5, atol=1e-5)

    print("KERNEL_OK")
</pallas_src>

<mosaic_0001>
module attributes {stable_mosaic.version = 11 : i64} {
  func.func @_embed_kernel(%arg0: i32, %arg1: memref<16x12xf32, #tpu.memory_space<vmem>>, %arg2: memref<16x4xi32, #tpu.memory_space<vmem>>, %arg3: memref<128x128xf32, #tpu.memory_space<vmem>>, %arg4: memref<12x128xf32, #tpu.memory_space<vmem>>, %arg5: memref<16x128xf32, #tpu.memory_space<vmem>>) attributes {dimension_semantics = [#tpu.dimension_semantics<parallel>], iteration_bounds = array<i64: 1>, scalar_prefetch = 0 : i64, scratch_operands = 0 : i64, tpu.core_type = #tpu.core_type<tc>, window_params = [{transform_indices = @transform_0, window_bounds = array<i64: 16, 12>}, {transform_indices = @transform_1, window_bounds = array<i64: 16, 4>}, {pipeline_mode = #tpu.pipeline_mode<synchronous>, transform_indices = @transform_2, window_bounds = array<i64: 128, 128>}, {pipeline_mode = #tpu.pipeline_mode<synchronous>, transform_indices = @transform_3, window_bounds = array<i64: 12, 128>}, {transform_indices = @transform_4, window_bounds = array<i64: 16, 128>}]} {
    %c0 = arith.constant 0 : index
    %c0_0 = arith.constant 0 : index
    %0 = vector.load %arg1[%c0, %c0_0] : memref<16x12xf32, #tpu.memory_space<vmem>>, vector<16x12xf32>
    %c0_1 = arith.constant 0 : index
    %c0_2 = arith.constant 0 : index
    %1 = vector.load %arg2[%c0_1, %c0_2] : memref<16x4xi32, #tpu.memory_space<vmem>>, vector<16x4xi32>
    %2 = tpu.iota {dimensions = array<i32: 1>} : vector<16x128xi32>
    %3 = vector.extract_strided_slice %1 {offsets = [0, 0], sizes = [16, 1], strides = [1, 1]} : vector<16x4xi32> to vector<16x1xi32>
    %4 = vector.broadcast %3 : vector<16x1xi32> to vector<16x128xi32>
    %5 = arith.cmpi eq, %2, %4 : vector<16x128xi32>
    %6 = vector.extract_strided_slice %1 {offsets = [0, 1], sizes = [16, 1], strides = [1, 1]} : vector<16x4xi32> to vector<16x1xi32>
    %7 = vector.broadcast %6 : vector<16x1xi32> to vector<16x128xi32>
    %8 = arith.cmpi eq, %2, %7 : vector<16x128xi32>
    %9 = arith.ori %5, %8 : vector<16x128xi1>
    %10 = vector.extract_strided_slice %1 {offsets = [0, 2], sizes = [16, 1], strides = [1, 1]} : vector<16x4xi32> to vector<16x1xi32>
    %11 = vector.broadcast %10 : vector<16x1xi32> to vector<16x128xi32>
    %12 = arith.cmpi eq, %2, %11 : vector<16x128xi32>
    %13 = arith.ori %9, %12 : vector<16x128xi1>
    %14 = vector.extract_strided_slice %1 {offsets = [0, 3], sizes = [16, 1], strides = [1, 1]} : vector<16x4xi32> to vector<16x1xi32>
    %15 = vector.broadcast %14 : vector<16x1xi32> to vector<16x128xi32>
    %16 = arith.cmpi eq, %2, %15 : vector<16x128xi32>
    %17 = arith.ori %13, %16 : vector<16x128xi1>
    %18 = arith.extui %17 : vector<16x128xi1> to vector<16x128xi32>
    %19 = arith.sitofp %18 : vector<16x128xi32> to vector<16x128xf32>
    %c0_3 = arith.constant 0 : index
    %c0_4 = arith.constant 0 : index
    %20 = vector.load %arg3[%c0_3, %c0_4] : memref<128x128xf32, #tpu.memory_space<vmem>>, vector<128x128xf32>
    %cst = arith.constant dense<0.000000e+00> : vector<16x128xf32>
    %21 = tpu.matmul %19, %20, %cst {dimension_numbers = #tpu.dot_dimension_numbers<[1], [0], [0], [1], [0, 0, 1, 1], [], []>} : vector<16x128xf32>, vector<128x128xf32>, vector<16x128xf32> -> vector<16x128xf32>
    %c0_5 = arith.constant 0 : index
    %c0_6 = arith.constant 0 : index
    %22 = vector.load %arg4[%c0_5, %c0_6] : memref<12x128xf32, #tpu.memory_space<vmem>>, vector<12x128xf32>
    %cst_7 = arith.constant dense<0.000000e+00> : vector<16x128xf32>
    %23 = tpu.matmul %0, %22, %cst_7 {dimension_numbers = #tpu.dot_dimension_numbers<[1], [0], [0], [1], [0, 0, 1, 1], [], []>} : vector<16x12xf32>, vector<12x128xf32>, vector<16x128xf32> -> vector<16x128xf32>
    %24 = arith.addf %21, %23 : vector<16x128xf32>
    %c0_8 = arith.constant 0 : index
    %c0_9 = arith.constant 0 : index
    %25 = vector.load %arg5[%c0_8, %c0_9] : memref<16x128xf32, #tpu.memory_space<vmem>>, vector<16x128xf32>
    tpu.vector_store %arg5[%c0_8, %c0_9], %24 {strides = array<i32>} : memref<16x128xf32, #tpu.memory_space<vmem>>, vector<16x128xf32>,
    return
  }
  func.func @transform_0(%arg0: i32) -> (i32, i32) {
    %c0_i32 = arith.constant 0 : i32
    %c0_i32_0 = arith.constant 0 : i32
    return %arg0, %c0_i32 : i32, i32
  }
  func.func @transform_1(%arg0: i32) -> (i32, i32) {
    %c0_i32 = arith.constant 0 : i32
    %c0_i32_0 = arith.constant 0 : i32
    return %arg0, %c0_i32 : i32, i32
  }
  func.func @transform_2(%arg0: i32) -> (i32, i32) {
    %c0_i32 = arith.constant 0 : i32
    %c0_i32_0 = arith.constant 0 : i32
    %c0_i32_1 = arith.constant 0 : i32
    return %c0_i32, %c0_i32_0 : i32, i32
  }
  func.func @transform_3(%arg0: i32) -> (i32, i32) {
    %c0_i32 = arith.constant 0 : i32
    %c0_i32_0 = arith.constant 0 : i32
    %c0_i32_1 = arith.constant 0 : i32
    return %c0_i32, %c0_i32_0 : i32, i32
  }
  func.func @transform_4(%arg0: i32) -> (i32, i32) {
    %c0_i32 = arith.constant 0 : i32
    %c0_i32_0 = arith.constant 0 : i32
    return %arg0, %c0_i32 : i32, i32
  }
}

</mosaic_0001>

<llo_original>
// kernel: tpu_custom_call.1
$region0: #{tpu_custom_call.1}
  #allocation0 [shape = 'u32[]', space=smem, size = 0x4, offset = 0x4, fixed_abs, tag = 'smem constant byte address 0x4 - core index']
  #allocation1 [shape = 'u32[144,128]{1,0:T(1,128)}', space=vmem, size = 0x12000, scoped, tag = 'internal scratch']
  %s0 = inlined_call_operand.vmem [shape: f32[16,12], index: 0, kind: input, shape index: {}]
  %s1 = inlined_call_operand.vmem [shape: s32[16,4], index: 1, kind: input, shape index: {}]
  %s2 = inlined_call_operand.hbm [shape: f32[128,128], index: 2, kind: input, shape index: {}]
  %s3 = inlined_call_operand.hbm [shape: f32[12,128], index: 3, kind: input, shape index: {}]
  %s4 = inlined_call_operand.hbm [shape: f32[16,128], index: 4, kind: output, shape index: {}]
  %s5 = sld [smem:[#allocation0]]
  $region34: #{tpu_custom_call.1} parent=0
    _
  %s7 = ssub.s32 1, %s5
  %s8 = scalar_select 0, %s7, %s5
  $region1: #{tpu_custom_call.1} parent=0
    #allocation2 [shape = 'u8[65536]{0}', space=vmem, size = 0x10000, scoped, tag = 'input window, operand 2, single buffered']
    #allocation3 [shape = 's32[1]{0}', space=sflag, size = 0x4, scoped, tag = 'scoped memory for tpu_custom_call.1']
    #allocation4 [shape = 's32[1]{0}', space=sflag, size = 0x4, scoped, tag = 'scoped memory for tpu_custom_call.1']
    #allocation5 [shape = 'u8[8192]{0}', space=vmem, size = 0x2000, scoped, tag = 'input window, operand 3, single buffered']
    #allocation6 [shape = 's32[1]{0}', space=sflag, size = 0x4, scoped, tag = 'scoped memory for tpu_custom_call.1']
    #allocation7 [shape = 'u8[8192]{0}', space=vmem, size = 0x2000, scoped, tag = 'output window, operand 0, single buffered']
    %9 = vsyncpa [#allocation3], 0
    %10 = vsyncpa [#allocation6], 0
    %11 = vsyncpa [#allocation4], 0
    // Predicated region
    $region2: #{tpu_custom_call.1} parent=1 // pred_check
      _
    $region3: #{tpu_custom_call.1} parent=1 // pred_check_branch
      %13 = sbr.rel (0) target = $region5
    $region4: #{tpu_custom_call.1} parent=1 // pred_region
      _
    $region5: #{tpu_custom_call.1} parent=1 // pred_fallthru
      _
    // Predicated region
    $region6: #{tpu_custom_call.1} parent=1 // pred_check
      _
    $region7: #{tpu_custom_call.1} parent=1 // pred_check_branch
      %15 = sbr.rel (0) target = $region9
    $region8: #{tpu_custom_call.1} parent=1 // pred_region
      _
    $region9: #{tpu_custom_call.1} parent=1 // pred_fallthru
      _
    // Predicated region
    $region10: #{tpu_custom_call.1} parent=1 // pred_check
      _
    $region11: #{tpu_custom_call.1} parent=1 // pred_check_branch
      %17 = sbr.rel (0) target = $region13
    $region12: #{tpu_custom_call.1} parent=1 // pred_region
      %s19 = ssub.s32 2048, 2048
      %20 = vsyncadd [#allocation3], %s19
      %s21 = sshll.u32 [#allocation2], 4
      %s22 = int_to_ptr.vmem [resolvable:$true] %s21
      %27 = dma.hbm_to_vmem [thread:$0]  %s2, 2048, %s22, [#allocation3], 128, 128, 8
    $region13: #{tpu_custom_call.1} parent=1 // pred_fallthru
      _
    // Predicated region
    $region14: #{tpu_custom_call.1} parent=1 // pred_check
      _
    $region15: #{tpu_custom_call.1} parent=1 // pred_check_branch
      %29 = sbr.rel (0) target = $region17
    $region16: #{tpu_custom_call.1} parent=1 // pred_region
      %s31 = ssub.s32 256, 256
      %32 = vsyncadd [#allocation6], %s31
      %s33 = sshll.u32 [#allocation5], 4
      %s34 = int_to_ptr.vmem [resolvable:$true] %s33
      %39 = dma.hbm_to_vmem [thread:$0]  %s3, 256, %s34, [#allocation6], 128, 128, 8
    $region17: #{tpu_custom_call.1} parent=1 // pred_fallthru
      _
    // Predicated region
    $region18: #{tpu_custom_call.1} parent=1 // pred_check
      _
    $region19: #{tpu_custom_call.1} parent=1 // pred_check_branch
      %41 = sbr.rel (0) target = $region21
    $region20: #{tpu_custom_call.1} parent=1 // pred_region
      %42 = dma.done [#allocation3], 2048
    $region21: #{tpu_custom_call.1} parent=1 // pred_fallthru
      _
    // Predicated region
    $region22: #{tpu_custom_call.1} parent=1 // pred_check
      _
    $region23: #{tpu_custom_call.1} parent=1 // pred_check_branch
      %44 = sbr.rel (0) target = $region25
    $region24: #{tpu_custom_call.1} parent=1 // pred_region
      %45 = dma.done [#allocation6], 256
    $region25: #{tpu_custom_call.1} parent=1 // pred_fallthru
      _
    %v46 = vld [vmem:[%s0] sm:$0xff]
    %v47 = vld [vmem:[%s0 + $0x8] sm:$0xff]
    %v48 = vld [vmem:[%s1] sm:$0xff]
    %v49 = vld [vmem:[%s1 + $0x8] sm:$0xff]
    %v50 = vlaneseq
    %v51 = vand.u32 %v50, 127
    %52 = vset.pattern.permute.xlu0 0
    %53 = vperm.xlu0 %52, %v48
    %v54 = vpop.permute.xlu0 %53
    %55 = vset.pattern.permute.xlu0 0
    %56 = vperm.xlu0 %55, %v49
    %v57 = vpop.permute.xlu0 %56
    %vm58 = vcmp.eq.s32.totalorder %v51, %v54
    %vm59 = vcmp.eq.s32.totalorder %v51, %v57
    %60 = vset.pattern.permute.xlu0 1
    %61 = vperm.xlu0 %60, %v48
    %v62 = vpop.permute.xlu0 %61
    %63 = vset.pattern.permute.xlu0 1
    %64 = vperm.xlu0 %63, %v49
    %v65 = vpop.permute.xlu0 %64
    %vm66 = vcmp.eq.s32.totalorder %v51, %v62
    %vm67 = vcmp.eq.s32.totalorder %v51, %v65
    %vm68 = vmor %vm58, %vm66
    %vm69 = vmor %vm59, %vm67
    %70 = vset.pattern.permute.xlu0 2
    %71 = vperm.xlu0 %70, %v48
    %v72 = vpop.permute.xlu0 %71
    %73 = vset.pattern.permute.xlu0 2
    %74 = vperm.xlu0 %73, %v49
    %v75 = vpop.permute.xlu0 %74
    %vm76 = vcmp.eq.s32.totalorder %v51, %v72
    %vm77 = vcmp.eq.s32.totalorder %v51, %v75
    %vm78 = vmor %vm68, %vm76
    %vm79 = vmor %vm69, %vm77
    %80 = vset.pattern.permute.xlu0 3
    %81 = vperm.xlu0 %80, %v48
    %v82 = vpop.permute.xlu0 %81
    %83 = vset.pattern.permute.xlu0 3
    %84 = vperm.xlu0 %83, %v49
    %v85 = vpop.permute.xlu0 %84
    %vm86 = vcmp.eq.s32.totalorder %v51, %v82
    %vm87 = vcmp.eq.s32.totalorder %v51, %v85
    %vm88 = vmor %vm78, %vm86
    %vm89 = vmor %vm79, %vm87
    %v90 = vsel %vm88, 1, 0
    %v91 = vsel %vm89, 1, 0
    %v92 = vcvt.s32.f32 %v90
    %v93 = vcvt.s32.f32 %v91
    %v94 = vld [vmem:[#allocation2] sm:$0xff]
    %v95 = vld [vmem:[#allocation2 + $0x8] sm:$0xff]
    %v96 = vld [vmem:[#allocation2 + $0x10] sm:$0xff]
    %v97 = vld [vmem:[#allocation2 + $0x18] sm:$0xff]
    %v98 = vld [vmem:[#allocation2 + $0x20] sm:$0xff]
    %v99 = vld [vmem:[#allocation2 + $0x28] sm:$0xff]
    %v100 = vld [vmem:[#allocation2 + $0x30] sm:$0xff]
    %v101 = vld [vmem:[#allocation2 + $0x38] sm:$0xff]
    %v102 = vld [vmem:[#allocation2 + $0x40] sm:$0xff]
    %v103 = vld [vmem:[#allocation2 + $0x48] sm:$0xff]
    %v104 = vld [vmem:[#allocation2 + $0x50] sm:$0xff]
    %v105 = vld [vmem:[#allocation2 + $0x58] sm:$0xff]
    %v106 = vld [vmem:[#allocation2 + $0x60] sm:$0xff]
    %v107 = vld [vmem:[#allocation2 + $0x68] sm:$0xff]
    %v108 = vld [vmem:[#allocation2 + $0x70] sm:$0xff]
    %v109 = vld [vmem:[#allocation2 + $0x78] sm:$0xff]
    %v110 = vld [vmem:[#allocation5] sm:$0xff]
    %v111 = vld [vmem:[#allocation5 + $0x8] sm:$0xf]
    %vm112 = vcmask 97280
    %v114 = vsel %vm112, %v46, 0
    %v117 = vsel %vm112, %v47, 0
    %vm119 = vcmask 1043456
    %v121 = vsel %vm119, %v111, 0
    %123 = vmatprep.subr.mxu0 0.0
    %124 = vmatpush1.msra.mxu0 %v110
    %125 = vmatprep.subr.mxu0 0.0
    %126 = vmatpush1.msra.mxu0 %v121
    %127 = vmatprep.subr.mxu0 0.0
    %128 = vmatpush1.msra.mxu0 0.0
    %129 = vmatprep.subr.mxu0 0.0
    %130 = vmatpush1.msra.mxu0 0.0
    %131 = vmatprep.subr.mxu0 0.0
    %132 = vmatpush1.msra.mxu0 0.0
    %133 = vmatprep.subr.mxu0 0.0
    %134 = vmatpush1.msra.mxu0 0.0
    %135 = vmatprep.subr.mxu0 0.0
    %136 = vmatpush1.msra.mxu0 0.0
    %137 = vmatprep.subr.mxu0 0.0
    %138 = vmatpush1.msra.mxu0 0.0
    %139 = vmatprep.subr.mxu0 0.0
    %140 = vmatpush1.msra.mxu0 0.0
    %141 = vmatprep.subr.mxu0 0.0
    %142 = vmatpush1.msra.mxu0 0.0
    %143 = vmatprep.subr.mxu0 0.0
    %144 = vmatpush1.msra.mxu0 0.0
    %145 = vmatprep.subr.mxu0 0.0
    %146 = vmatpush1.msra.mxu0 0.0
    %147 = vmatprep.subr.mxu0 0.0
    %148 = vmatpush1.msra.mxu0 0.0
    %149 = vmatprep.subr.mxu0 0.0
    %150 = vmatpush1.msra.mxu0 0.0
    %151 = vmatprep.subr.mxu0 0.0
    %152 = vmatpush1.msra.mxu0 0.0
    %153 = vmatprep.subr.mxu0 0.0
    %154 = vmatpush1.msra.mxu0 0.0
    %155 = vmatprep.subr.mxu0 0.0
    %156 = vmatpush1.msra.mxu0 0.0
    %157 = vmatprep.subr.mxu0 0.0
    %158 = vmatpush1.msra.mxu0 0.0
    %159 = vmatprep.subr.mxu0 0.0
    %160 = vmatpush1.msra.mxu0 0.0
    %161 = vmatprep.subr.mxu0 0.0
    %162 = vmatpush1.msra.mxu0 0.0
    %163 = vmatprep.subr.mxu0 0.0
    %164 = vmatpush1.msra.mxu0 0.0
    %165 = vmatprep.subr.mxu0 0.0
    %166 = vmatpush1.msra.mxu0 0.0
    %167 = vmatprep.subr.mxu0 0.0
    %168 = vmatpush1.msra.mxu0 0.0
    %169 = vmatprep.subr.mxu0 0.0
    %170 = vmatpush1.msra.mxu0 0.0
    %171 = vmatprep.subr.mxu0 0.0
    %172 = vmatpush1.msra.mxu0 0.0
    %173 = vmatprep.subr.mxu0 0.0
    %174 = vmatpush1.msra.mxu0 0.0
    %175 = vmatprep.subr.mxu0 0.0
    %176 = vmatpush1.msra.mxu0 0.0
    %177 = vmatprep.subr.mxu0 0.0
    %178 = vmatpush1.msra.mxu0 0.0
    %179 = vmatprep.subr.mxu0 0.0
    %180 = vmatpush1.msra.mxu0 0.0
    %181 = vmatprep.subr.mxu0 0.0
    %182 = vmatpush1.msra.mxu0 0.0
    %183 = vmatprep.subr.mxu0 0.0
    %184 = vmatpush1.msra.mxu0 0.0
    %185 = vmatprep.subr.mxu0 0.0
    %186 = vmatpush1.msra.mxu0 0.0
    %187 = vmatprep.mubr.f32.mxu0 0.0
    %188 = vmatmul.mubr.f32.gmra.mrb[0].mxu0 %v114
    %v189 = vpop.f32.mrb[0].mxu0
    %v190 = vadd.f32 0.0, %v189
    %v191 = vpop.f32.mrb[0].mxu0
    %192 = vmatprep.mubr.f32.mxu0 0.0
    %193 = vmatmul.mubr.f32.gmra.mrb[0].mxu0 %v117
    %v194 = vpop.f32.mrb[0].mxu0
    %v195 = vadd.f32 0.0, %v194
    %v196 = vpop.f32.mrb[0].mxu0
    %197 = vdwg.mxu0
    %198 = vmatprep.subr.mxu0 0.0
    %199 = vmatpush1.msra.mxu0 %v94
    %200 = vmatprep.subr.mxu0 0.0
    %201 = vmatpush1.msra.mxu0 %v95
    %202 = vmatprep.subr.mxu0 0.0
    %203 = vmatpush1.msra.mxu0 %v96
    %204 = vmatprep.subr.mxu0 0.0
    %205 = vmatpush1.msra.mxu0 %v97
    %206 = vmatprep.subr.mxu0 0.0
    %207 = vmatpush1.msra.mxu0 %v98
    %208 = vmatprep.subr.mxu0 0.0
    %209 = vmatpush1.msra.mxu0 %v99
    %210 = vmatprep.subr.mxu0 0.0
    %211 = vmatpush1.msra.mxu0 %v100
    %212 = vmatprep.subr.mxu0 0.0
    %213 = vmatpush1.msra.mxu0 %v101
    %214 = vmatprep.subr.mxu0 0.0
    %215 = vmatpush1.msra.mxu0 %v102
    %216 = vmatprep.subr.mxu0 0.0
    %217 = vmatpush1.msra.mxu0 %v103
    %218 = vmatprep.subr.mxu0 0.0
    %219 = vmatpush1.msra.mxu0 %v104
    %220 = vmatprep.subr.mxu0 0.0
    %221 = vmatpush1.msra.mxu0 %v105
    %222 = vmatprep.subr.mxu0 0.0
    %223 = vmatpush1.msra.mxu0 %v106
    %224 = vmatprep.subr.mxu0 0.0
    %225 = vmatpush1.msra.mxu0 %v107
    %226 = vmatprep.subr.mxu0 0.0
    %227 = vmatpush1.msra.mxu0 %v108
    %228 = vmatprep.subr.mxu0 0.0
    %229 = vmatpush1.msra.mxu0 %v109
    %230 = vmatprep.subr.mxu0 0.0
    %231 = vmatpush1.msra.mxu0 0.0
    %232 = vmatprep.subr.mxu0 0.0
    %233 = vmatpush1.msra.mxu0 0.0
    %234 = vmatprep.subr.mxu0 0.0
    %235 = vmatpush1.msra.mxu0 0.0
    %236 = vmatprep.subr.mxu0 0.0
    %237 = vmatpush1.msra.mxu0 0.0
    %238 = vmatprep.subr.mxu0 0.0
    %239 = vmatpush1.msra.mxu0 0.0
    %240 = vmatprep.subr.mxu0 0.0
    %241 = vmatpush1.msra.mxu0 0.0
    %242 = vmatprep.subr.mxu0 0.0
    %243 = vmatpush1.msra.mxu0 0.0
    %244 = vmatprep.subr.mxu0 0.0
    %245 = vmatpush1.msra.mxu0 0.0
    %246 = vmatprep.subr.mxu0 0.0
    %247 = vmatpush1.msra.mxu0 0.0
    %248 = vmatprep.subr.mxu0 0.0
    %249 = vmatpush1.msra.mxu0 0.0
    %250 = vmatprep.subr.mxu0 0.0
    %251 = vmatpush1.msra.mxu0 0.0
    %252 = vmatprep.subr.mxu0 0.0
    %253 = vmatpush1.msra.mxu0 0.0
    %254 = vmatprep.subr.mxu0 0.0
    %255 = vmatpush1.msra.mxu0 0.0
    %256 = vmatprep.subr.mxu0 0.0
    %257 = vmatpush1.msra.mxu0 0.0
    %258 = vmatprep.subr.mxu0 0.0
    %259 = vmatpush1.msra.mxu0 0.0
    %260 = vmatprep.subr.mxu0 0.0
    %261 = vmatpush1.msra.mxu0 0.0
    %262 = vmatprep.mubr.f32.mxu0 0.0
    %263 = vmatmul.mubr.f32.gmra.mrb[0].mxu0 %v92
    %v264 = vpop.f32.mrb[0].mxu0
    %v265 = vadd.f32 %v190, %v264
    %v266 = vpop.f32.mrb[0].mxu0
    %267 = vmatprep.mubr.f32.mxu0 0.0
    %268 = vmatmul.mubr.f32.gmra.mrb[0].mxu0 %v93
    %v269 = vpop.f32.mrb[0].mxu0
    %v270 = vadd.f32 %v195, %v269
    %v271 = vpop.f32.mrb[0].mxu0
    %272 = vdwg.mxu0
    %273 = vst [vmem:[#allocation7] sm:$0xff] %v265
    %274 = vst [vmem:[#allocation7 + $0x8] sm:$0xff] %v270
    // Predicated region
    $region26: #{tpu_custom_call.1} parent=1 // pred_check
      _
    $region27: #{tpu_custom_call.1} parent=1 // pred_check_branch
      %276 = sbr.rel (0) target = $region29
    $region28: #{tpu_custom_call.1} parent=1 // pred_region
      %s278 = ssub.s32 256, 256
      %279 = vsyncadd [#allocation4], %s278
      %s280 = sshll.u32 [#allocation7], 4
      %s281 = int_to_ptr.vmem [resolvable:$true] %s280
      %286 = dma.vmem_to_hbm [thread:$0]  %s281, 256, %s4, [#allocation4], 128, 128, 8
    $region29: #{tpu_custom_call.1} parent=1 // pred_fallthru
      _
    // Predicated region
    $region30: #{tpu_custom_call.1} parent=1 // pred_check
      _
    $region31: #{tpu_custom_call.1} parent=1 // pred_check_branch
      %288 = sbr.rel (0) target = $region33
    $region32: #{tpu_custom_call.1} parent=1 // pred_region
      %289 = dma.done [#allocation4], 256
    $region33: #{tpu_custom_call.1} parent=1 // pred_fallthru
      _
    %290 = vsyncpa [#allocation3], 1
    %291 = vsyncpa [#allocation6], 1
    %292 = vsyncpa [#allocation4], 1

</llo_original>
